<compile_context>
chip_gen: v5e
topology: v5e:2x2
jax: 0.10.0
libtpu: 0.0.40
codegen_flags: <defaults>
</compile_context>

<pallas_src>
import jax
import jax.numpy as jnp
from jax.experimental import pallas as pl
from jax.experimental.pallas import tpu as pltpu

_EPS = 1e-11


# ----------------------------- Pallas kernels ------------------------------

def _denorm_kernel(img_ref, mean_ref, std_ref, out_ref):
    # img * std + mean   (mean/std broadcast per row)
    out_ref[...] = img_ref[...] * std_ref[...] + mean_ref[...]


def _kfilter_kernel(re_ref, im_ref, w1_ref, b1_ref, w2_ref, b2_ref,
                    ore_ref, oim_ref):
    re = re_ref[...]
    im = im_ref[...]
    mag = jnp.sqrt(re * re + im * im)                  # |ks|
    # w/b already ReLU'd in the wrapper (hoisted out of the grid loop)
    x = jnp.maximum(w1_ref[...] * mag + b1_ref[...], 0.0)
    x = w2_ref[...] * x + b2_ref[...]
    denom = mag + _EPS
    inv = pl.reciprocal(denom, approx=True)            # EUP slot (free-ish)
    inv = inv * (2.0 - denom * inv)                    # Newton step -> f32 acc.
    scale = jnp.abs(x) * inv                           # x.abs() / (|ks|+eps)
    ore_ref[...] = re * scale                          # ks * scale (re/im)
    oim_ref[...] = im * scale


def _abs_norm_kernel(re_ref, im_ref, mean_ref, inv_std_ref, out_ref):
    re = re_ref[...]
    im = im_ref[...]
    y = jnp.sqrt(re * re + im * im)                    # |ifft(ks)|
    out_ref[...] = (y - mean_ref[...]) * inv_std_ref[...]


# ----------------------------- tiling helpers --------------------------------

def _round_up(x, m):
    return ((x + m - 1) // m) * m


def _vmem_capacity_bytes():
    try:
        return int(pltpu.get_tpu_info().vmem_capacity_bytes)
    except Exception:
        return 64 << 20  # conservative fallback (v7x per-TC VMEM)


def _choose_row_tile(bc, hw, n_big_arrays):
    """Largest row tile (multiple of 8) whose double-buffered working set
    stays well under the per-chip VMEM capacity."""
    cap = _vmem_capacity_bytes()
    budget = min(cap // 2, 48 << 20)                 # leave headroom
    bytes_per_row = n_big_arrays * 2 * hw * 4        # 2x double-buffer, f32
    max_rows = max(8, budget // max(bytes_per_row, 1))
    max_rows = max((max_rows // 8) * 8, 8)
    max_rows = min(max_rows, 1024)
    tile = min(max_rows, _round_up(bc, 8))
    vmem_limit = min(cap * 3 // 4, 96 << 20)
    return tile, vmem_limit


def _pad_rows(x, rows):
    pad = rows - x.shape[0]
    if pad:
        x = jnp.pad(x, ((0, pad), (0, 0)))
    return x


def _row_spec(tile, hw):
    return pl.BlockSpec((tile, hw), lambda i: (i, 0))


def _col_spec(tile):
    return pl.BlockSpec((tile, 1), lambda i: (i, 0))


def _weight_spec(hw):
    return pl.BlockSpec((1, hw), lambda i: (0, 0))


def _compiler_params(vmem_limit):
    return pltpu.CompilerParams(
        dimension_semantics=("parallel",),
        vmem_limit_bytes=int(vmem_limit),
    )


# ----------------------------- pallas_call wrappers --------------------------

def _denorm(img2d, mean_col, std_col):
    bc, hw = img2d.shape
    tile, vmem_limit = _choose_row_tile(bc, hw, n_big_arrays=2)  # in + out
    bc_pad = _round_up(bc, tile)
    out = pl.pallas_call(
        _denorm_kernel,
        out_shape=jax.ShapeDtypeStruct((bc_pad, hw), jnp.float32),
        grid=(bc_pad // tile,),
        in_specs=[_row_spec(tile, hw), _col_spec(tile), _col_spec(tile)],
        out_specs=_row_spec(tile, hw),
        compiler_params=_compiler_params(vmem_limit),
    )(_pad_rows(img2d, bc_pad), _pad_rows(mean_col, bc_pad),
      _pad_rows(std_col, bc_pad))
    return out[:bc]


def _kfilter(re2d, im2d, w1, b1, w2, b2):
    bc, hw = re2d.shape
    tile, vmem_limit = _choose_row_tile(bc, hw, n_big_arrays=4)  # 2 in + 2 out
    bc_pad = _round_up(bc, tile)
    ore, oim = pl.pallas_call(
        _kfilter_kernel,
        out_shape=(jax.ShapeDtypeStruct((bc_pad, hw), jnp.float32),
                   jax.ShapeDtypeStruct((bc_pad, hw), jnp.float32)),
        grid=(bc_pad // tile,),
        in_specs=[_row_spec(tile, hw), _row_spec(tile, hw),
                  _weight_spec(hw), _weight_spec(hw),
                  _weight_spec(hw), _weight_spec(hw)],
        out_specs=(_row_spec(tile, hw), _row_spec(tile, hw)),
        input_output_aliases={0: 0, 1: 1},   # re->ore, im->oim (reuse HBM)
        compiler_params=_compiler_params(vmem_limit),
    )(_pad_rows(re2d, bc_pad), _pad_rows(im2d, bc_pad), w1, b1, w2, b2)
    return ore[:bc], oim[:bc]


def _abs_norm(re2d, im2d, mean_col, inv_std_col):
    bc, hw = re2d.shape
    tile, vmem_limit = _choose_row_tile(bc, hw, n_big_arrays=3)  # 2 in + out
    bc_pad = _round_up(bc, tile)
    out = pl.pallas_call(
        _abs_norm_kernel,
        out_shape=jax.ShapeDtypeStruct((bc_pad, hw), jnp.float32),
        grid=(bc_pad // tile,),
        in_specs=[_row_spec(tile, hw), _row_spec(tile, hw),
                  _col_spec(tile), _col_spec(tile)],
        out_specs=_row_spec(tile, hw),
        compiler_params=_compiler_params(vmem_limit),
    )(_pad_rows(re2d, bc_pad), _pad_rows(im2d, bc_pad),
      _pad_rows(mean_col, bc_pad), _pad_rows(inv_std_col, bc_pad))
    return out[:bc]


# ----------------------------- FFT glue (plain JAX) -------------------------

def spatial2kspace(x):
    x = jnp.fft.ifftshift(x, axes=(-2, -1))
    x = jnp.fft.fft2(x, axes=(-2, -1), norm="ortho")
    return jnp.fft.fftshift(x, axes=(-2, -1))


def kspace2spatial(k):
    k = jnp.fft.ifftshift(k, axes=(-2, -1))
    k = jnp.fft.ifft2(k, axes=(-2, -1), norm="ortho")
    return jnp.fft.fftshift(k, axes=(-2, -1))


# ----------------------------- forward pass ---------------------------------

def active_layer_forward(img, mean, std, w1, b1, w2, b2):
    n, c, h, w = img.shape
    bc, hw = n * c, h * w

    img2d = img.reshape(bc, hw).astype(jnp.float32)
    # per-batch mean/std (N,1,1,1) -> per-row (N*C, 1)
    mean_col = jnp.broadcast_to(mean.reshape(n, 1), (n, c)) \
                  .reshape(bc, 1).astype(jnp.float32)
    std_col = jnp.broadcast_to(std.reshape(n, 1), (n, c)) \
                 .reshape(bc, 1).astype(jnp.float32)
    inv_std_col = 1.0 / (std_col + _EPS)          # once per row, in the wrapper

    # 1) de-normalize: img * std + mean   (Pallas)
    x = _denorm(img2d, mean_col, std_col).reshape(n, c, h, w)

    # 2) forward FFT to k-space (JAX; no Pallas FFT primitive)
    ks = spatial2kspace(x)
    # TODO(synk): planar real/imag extraction costs one extra HBM pass each
    # way; an in-kernel complex64 deinterleave via pltpu.bitcast could remove
    # it but needs a lane shuffle.
    re = jnp.real(ks).reshape(bc, hw).astype(jnp.float32)
    im = jnp.imag(ks).reshape(bc, hw).astype(jnp.float32)

    # 3) active k-space filter (Pallas) — weight ReLUs hoisted here (weights
    #    are grid-resident inside the kernel, so no per-step re-ReLU).
    w1f = jnp.maximum(w1.reshape(1, hw), 0.0).astype(jnp.float32)
    b1f = jnp.maximum(b1.reshape(1, hw), 0.0).astype(jnp.float32)
    w2f = jnp.maximum(w2.reshape(1, hw), 0.0).astype(jnp.float32)
    b2f = jnp.maximum(b2.reshape(1, hw), 0.0).astype(jnp.float32)
    ore, oim = _kfilter(re, im, w1f, b1f, w2f, b2f)
    ks_f = jax.lax.complex(ore, oim).reshape(n, c, h, w)

    # 4) inverse FFT back to image space (JAX)
    y = kspace2spatial(ks_f)
    yre = jnp.real(y).reshape(bc, hw).astype(jnp.float32)
    yim = jnp.imag(y).reshape(bc, hw).astype(jnp.float32)

    # 5) |y| then re-normalize: (|y| - mean) * 1/(std + 1e-11)   (Pallas)
    out = _abs_norm(yre, yim, mean_col, inv_std_col)
    return out.reshape(n, c, h, w)


# Pure-JAX reference (for correctness check)
def active_layer_reference(img, mean, std, w1, b1, w2, b2):
    ks = spatial2kspace(img * std + mean)
    mag = jnp.abs(ks)
    x = jnp.maximum(jnp.maximum(w1, 0.0) * mag + jnp.maximum(b1, 0.0), 0.0)
    x = jnp.maximum(w2, 0.0) * x + jnp.maximum(b2, 0.0)
    ks = ks * jnp.abs(x) / (mag + _EPS)
    y = jnp.abs(kspace2spatial(ks))
    return (y - mean) / (std + _EPS)


# ----------------------------- main ------------------------------------------

if __name__ == "__main__":
    key = jax.random.PRNGKey(0)
    k_img, k_mean, k_std = jax.random.split(key, 3)

    N, C, H, W = 2, 4, 16, 16
    img = jax.random.normal(k_img, (N, C, H, W), dtype=jnp.float32)
    mean = 0.1 * jax.random.normal(k_mean, (N, 1, 1, 1), dtype=jnp.float32)
    std = jnp.abs(jax.random.normal(k_std, (N, 1, 1, 1), dtype=jnp.float32)) + 0.5

    # ActiveLayer(shape=(H, W)) parameters, deterministic per the module __init__
    w1 = jnp.ones((H, W), dtype=jnp.float32)
    b1 = jnp.ones((H, W), dtype=jnp.float32) * 0.1
    w2 = jnp.ones((H, W), dtype=jnp.float32)
    b2 = jnp.ones((H, W), dtype=jnp.float32) * 0.1

    out = active_layer_forward(img, mean, std, w1, b1, w2, b2)
    out = jax.block_until_ready(out)

    ref = jax.block_until_ready(
        active_layer_reference(img, mean, std, w1, b1, w2, b2))
    assert out.shape == (N, C, H, W)
    assert jnp.allclose(out, ref, atol=1e-4, rtol=1e-4)

    print("KERNEL_OK")
</pallas_src>

<mosaic_0001>
module attributes {stable_mosaic.version = 11 : i64} {
  func.func @_denorm_kernel(%arg0: i32, %arg1: memref<8x256xf32, #tpu.memory_space<vmem>>, %arg2: memref<8x1xf32, #tpu.memory_space<vmem>>, %arg3: memref<8x1xf32, #tpu.memory_space<vmem>>, %arg4: memref<8x256xf32, #tpu.memory_space<vmem>>) attributes {dimension_semantics = [#tpu.dimension_semantics<parallel>], iteration_bounds = array<i64: 1>, scalar_prefetch = 0 : i64, scratch_operands = 0 : i64, tpu.core_type = #tpu.core_type<tc>, window_params = [{transform_indices = @transform_0, window_bounds = array<i64: 8, 256>}, {transform_indices = @transform_1, window_bounds = array<i64: 8, 1>}, {transform_indices = @transform_2, window_bounds = array<i64: 8, 1>}, {transform_indices = @transform_3, window_bounds = array<i64: 8, 256>}]} {
    %c0 = arith.constant 0 : index
    %c0_0 = arith.constant 0 : index
    %0 = vector.load %arg1[%c0, %c0_0] : memref<8x256xf32, #tpu.memory_space<vmem>>, vector<8x256xf32>
    %c0_1 = arith.constant 0 : index
    %c0_2 = arith.constant 0 : index
    %1 = vector.load %arg3[%c0_1, %c0_2] : memref<8x1xf32, #tpu.memory_space<vmem>>, vector<8x1xf32>
    %2 = vector.broadcast %1 : vector<8x1xf32> to vector<8x256xf32>
    %3 = arith.mulf %0, %2 : vector<8x256xf32>
    %c0_3 = arith.constant 0 : index
    %c0_4 = arith.constant 0 : index
    %4 = vector.load %arg2[%c0_3, %c0_4] : memref<8x1xf32, #tpu.memory_space<vmem>>, vector<8x1xf32>
    %5 = vector.broadcast %4 : vector<8x1xf32> to vector<8x256xf32>
    %6 = arith.addf %3, %5 : vector<8x256xf32>
    %c0_5 = arith.constant 0 : index
    %c0_6 = arith.constant 0 : index
    %7 = vector.load %arg4[%c0_5, %c0_6] : memref<8x256xf32, #tpu.memory_space<vmem>>, vector<8x256xf32>
    tpu.vector_store %arg4[%c0_5, %c0_6], %6 {strides = array<i32>} : memref<8x256xf32, #tpu.memory_space<vmem>>, vector<8x256xf32>,
    return
  }
  func.func @transform_0(%arg0: i32) -> (i32, i32) {
    %c0_i32 = arith.constant 0 : i32
    %c0_i32_0 = arith.constant 0 : i32
    return %arg0, %c0_i32 : i32, i32
  }
  func.func @transform_1(%arg0: i32) -> (i32, i32) {
    %c0_i32 = arith.constant 0 : i32
    %c0_i32_0 = arith.constant 0 : i32
    return %arg0, %c0_i32 : i32, i32
  }
  func.func @transform_2(%arg0: i32) -> (i32, i32) {
    %c0_i32 = arith.constant 0 : i32
    %c0_i32_0 = arith.constant 0 : i32
    return %arg0, %c0_i32 : i32, i32
  }
  func.func @transform_3(%arg0: i32) -> (i32, i32) {
    %c0_i32 = arith.constant 0 : i32
    %c0_i32_0 = arith.constant 0 : i32
    return %arg0, %c0_i32 : i32, i32
  }
}

</mosaic_0001>

<llo_original>
// kernel: tpu_custom_call.1
$region0: #{tpu_custom_call.1}
  #allocation0 [shape = 'u32[]', space=smem, size = 0x4, offset = 0x4, fixed_abs, tag = 'smem constant byte address 0x4 - core index']
  #allocation1 [shape = 'u32[72,128]{1,0:T(1,128)}', space=vmem, size = 0x9000, scoped, tag = 'internal scratch']
  %s0 = inlined_call_operand.vmem [shape: f32[8,256], index: 0, kind: input, shape index: {}]
  %s1 = inlined_call_operand.vmem [shape: f32[8,1], index: 1, kind: input, shape index: {}]
  %s2 = inlined_call_operand.vmem [shape: f32[8,1], index: 2, kind: input, shape index: {}]
  %s3 = inlined_call_operand.hbm [shape: f32[8,256], index: 3, kind: output, shape index: {}]
  %s4 = sld [smem:[#allocation0]]
  $region22: #{tpu_custom_call.1} parent=0
    _
  %s6 = ssub.s32 1, %s4
  %s7 = scalar_select 0, %s6, %s4
  $region1: #{tpu_custom_call.1} parent=0
    #allocation2 [shape = 'u8[8192]{0}', space=vmem, size = 0x2000, scoped, tag = 'output window, operand 0, single buffered']
    #allocation3 [shape = 's32[1]{0}', space=sflag, size = 0x4, scoped, tag = 'scoped memory for tpu_custom_call.1']
    %8 = vsyncpa [#allocation3], 0
    // Predicated region
    $region2: #{tpu_custom_call.1} parent=1 // pred_check
      _
    $region3: #{tpu_custom_call.1} parent=1 // pred_check_branch
      %10 = sbr.rel (0) target = $region5
    $region4: #{tpu_custom_call.1} parent=1 // pred_region
      _
    $region5: #{tpu_custom_call.1} parent=1 // pred_fallthru
      _
    // Predicated region
    $region6: #{tpu_custom_call.1} parent=1 // pred_check
      _
    $region7: #{tpu_custom_call.1} parent=1 // pred_check_branch
      %12 = sbr.rel (0) target = $region9
    $region8: #{tpu_custom_call.1} parent=1 // pred_region
      _
    $region9: #{tpu_custom_call.1} parent=1 // pred_fallthru
      _
    // Predicated region
    $region10: #{tpu_custom_call.1} parent=1 // pred_check
      _
    $region11: #{tpu_custom_call.1} parent=1 // pred_check_branch
      %14 = sbr.rel (0) target = $region13
    $region12: #{tpu_custom_call.1} parent=1 // pred_region
      _
    $region13: #{tpu_custom_call.1} parent=1 // pred_fallthru
      _
    %v15 = vld [vmem:[%s0] sm:$0xff]
    %v16 = vld [vmem:[%s0 + $0x8] sm:$0xff]
    %v17 = vld [vmem:[%s2] sm:$0xff]
    %19 = vset.pattern.permute.xlu0 0
    %20 = vperm.xlu0 %19, %v17
    %v21 = vpop.permute.xlu0 %20
    %v23 = vmul.f32 %v15, %v21
    %v24 = vmul.f32 %v16, %v21
    %v25 = vld [vmem:[%s1] sm:$0xff]
    %27 = vset.pattern.permute.xlu0 0
    %28 = vperm.xlu0 %27, %v25
    %v29 = vpop.permute.xlu0 %28
    %v31 = vadd.f32 %v23, %v29
    %v32 = vadd.f32 %v24, %v29
    %33 = vst [vmem:[#allocation2] sm:$0xff] %v31
    %34 = vst [vmem:[#allocation2 + $0x8] sm:$0xff] %v32
    // Predicated region
    $region14: #{tpu_custom_call.1} parent=1 // pred_check
      _
    $region15: #{tpu_custom_call.1} parent=1 // pred_check_branch
      %36 = sbr.rel (0) target = $region17
    $region16: #{tpu_custom_call.1} parent=1 // pred_region
      %38 = vsyncadd [#allocation3], 0
      %s40 = sshll.u32 [#allocation2], 4
      %s41 = int_to_ptr.vmem [resolvable:$true] %s40
      %s42 = sshll.u32 %s3, 4
      %s43 = int_to_ptr.hbm [resolvable:$true] %s42
      %45 = dma.vmem_to_hbm [thread:$0]  %s41, 256, %s43, [#allocation3]
    $region17: #{tpu_custom_call.1} parent=1 // pred_fallthru
      _
    // Predicated region
    $region18: #{tpu_custom_call.1} parent=1 // pred_check
      _
    $region19: #{tpu_custom_call.1} parent=1 // pred_check_branch
      %47 = sbr.rel (0) target = $region21
    $region20: #{tpu_custom_call.1} parent=1 // pred_region
      %49 = dma.done [#allocation3], 256
    $region21: #{tpu_custom_call.1} parent=1 // pred_fallthru
      _
    %50 = vsyncpa [#allocation3], 1

</llo_original>
